<compile_context>
chip_gen: v7x
topology: tpu7x:2x2x1
jax: 0.10.0
libtpu: 0.0.40
codegen_flags: <defaults>
</compile_context>

<pallas_src>
import functools
import math

import jax
import jax.numpy as jnp
from jax.experimental import pallas as pl
from jax.experimental.pallas import tpu as pltpu


def _round_up(x, m):
    return ((x + m - 1) // m) * m


def _usable_vmem_bytes():
    """Physical VMEM minus headroom (Mosaic scratch, semaphores, misc)."""
    try:
        cap = int(pltpu.get_tpu_info().vmem_capacity_bytes)
    except Exception:
        cap = 64 << 20  # conservative: v7x has 64 MiB per TensorCore
    return max(cap - (16 << 20), 16 << 20)


def _vmem_need_bytes(F1, F2, tc, tb, w_item, out_item, feat_item):
    """Rough per-step VMEM footprint under double-buffered pipelining."""
    w = 2 * (F1 + F2) * 2 * tc * w_item          # fused weight slabs
    feats = 2 * tb * (F1 + F2) * feat_item       # feature tiles (streamed)
    outs = 2 * 3 * tb * tc * out_item            # three output tiles
    biases = 2 * 3 * 8 * tc * 4                  # (1,tc) f32, 8-sublane padded
    return w + feats + outs + biases + (2 << 20)  # misc headroom


# ----------------------------------------------------------------------------
# Pallas kernel: two wide matmuls per grid step.  Features arrive f32 and are
# cast to the weight compute dtype (bf16) in-kernel.
# ----------------------------------------------------------------------------
def _bert_resnet_kernel(m1_ref, m2_ref, wa_ref, wb_ref,
                        b1_ref, b2_ref, bmm_ref,
                        text_ref, image_ref, mm_ref, *, tc):
    cdt = wa_ref.dtype
    m1 = m1_ref[...].astype(cdt)                 # (tb, F1)
    m2 = m2_ref[...].astype(cdt)                 # (tb, F2)

    out1 = jnp.dot(m1, wa_ref[0], preferred_element_type=jnp.float32)  # (tb, 2tc)
    out2 = jnp.dot(m2, wb_ref[0], preferred_element_type=jnp.float32)  # (tb, 2tc)

    text_ref[...] = (out1[:, :tc] + b1_ref[...]).astype(text_ref.dtype)
    image_ref[...] = (out2[:, :tc] + b2_ref[...]).astype(image_ref.dtype)
    mm_ref[...] = (out1[:, tc:] + out2[:, tc:] + bmm_ref[...]).astype(mm_ref.dtype)


# ----------------------------------------------------------------------------
# One-time planning: class tiling depends only on (F1, F2, C) and the chip.
# ----------------------------------------------------------------------------
def make_plan(F1, F2, C, *, compute_dtype=jnp.bfloat16, out_dtype=jnp.float32,
              ref_batch_tile=256):
    usable = _usable_vmem_bytes()
    w_item = jnp.dtype(compute_dtype).itemsize
    out_item = jnp.dtype(out_dtype).itemsize

    C_pad_full = _round_up(C, 128)
    tc = C_pad_full
    # Prefer nct == 1 (no feature re-reads); shrink tc only if the fused
    # slabs + representative-batch-tile working set would not fit in VMEM.
    while tc > 128 and _vmem_need_bytes(F1, F2, tc, ref_batch_tile,
                                        w_item, out_item, 4) > usable:
        tc = _round_up(max(tc // 2, 128), 128)
    nct = pl.cdiv(C_pad_full, tc)
    C_pad = nct * tc

    return {
        "F1": F1, "F2": F2, "C": C, "C_pad": C_pad, "tc": tc, "nct": nct,
        "compute_dtype": compute_dtype, "out_dtype": out_dtype,
        "usable_vmem": usable,
    }


# ----------------------------------------------------------------------------
# One-time parameter prep: pad C, fuse [head | mm] per class tile, cast bf16.
# Call once at model load; do NOT call per forward.
# ----------------------------------------------------------------------------
def prepare_params(params, plan):
    C, C_pad, tc, nct = plan["C"], plan["C_pad"], plan["tc"], plan["nct"]
    cdt = plan["compute_dtype"]

    def fuse(w_head, w_mm_half):
        f = w_head.shape[0]
        wp = jnp.pad(w_head, ((0, 0), (0, C_pad - C)))
        wm = jnp.pad(w_mm_half, ((0, 0), (0, C_pad - C)))
        fused = jnp.concatenate(
            [wp.reshape(f, nct, tc), wm.reshape(f, nct, tc)], axis=-1)
        return jnp.transpose(fused, (1, 0, 2)).astype(cdt)     # (nct, f, 2*tc)

    def pad_bias(b):
        return jnp.pad(jnp.reshape(b, (1, C)).astype(jnp.float32),
                       ((0, 0), (0, C_pad - C)))

    prepared = {
        "wa": fuse(params["w1"], params["wmm1"]),               # (nct, F1, 2tc)
        "wb": fuse(params["w2"], params["wmm2"]),               # (nct, F2, 2tc)
        "b1": pad_bias(params["b1"]),
        "b2": pad_bias(params["b2"]),
        "bmm": pad_bias(params["bmm"]),
    }
    return jax.tree_util.tree_map(jnp.asarray, prepared)


# ----------------------------------------------------------------------------
# Forward: drives pallas_call with batch tiling chosen from B and VMEM budget.
# ----------------------------------------------------------------------------
def bert_resnet_forward(m1_feature, m2_feature, prepared, plan, *,
                        batch_tile=None):
    """BertResnet (fuse='concat') forward. Returns (text, image, mm) logits."""
    B, F1 = m1_feature.shape
    B2, F2 = m2_feature.shape
    assert B == B2 and F1 == plan["F1"] and F2 == plan["F2"]

    tc, nct, C_pad, C = plan["tc"], plan["nct"], plan["C_pad"], plan["C"]
    usable = plan["usable_vmem"]
    cdt = plan["compute_dtype"]
    out_dtype = plan["out_dtype"]
    w_item = jnp.dtype(cdt).itemsize
    out_item = jnp.dtype(out_dtype).itemsize
    feat_item = jnp.dtype(m1_feature.dtype).itemsize

    # --- batch tile selection (multiple of 16; VMEM- and chip-aware).
    if batch_tile is None:
        tb_cap = 512 if usable >= (96 << 20) else 256   # v6e/v5e 128MiB vs v7x 64MiB
        tb = min(_round_up(B, 16), tb_cap)
    else:
        tb = _round_up(batch_tile, 16)
    while (tb > 16 and
           _vmem_need_bytes(F1, F2, tc, tb, w_item, out_item, feat_item) > usable):
        tb = max(16, _round_up(tb // 2, 16))
    B_pad = _round_up(B, tb)
    nbt = B_pad // tb
    # v7x has 2 TensorCores: if the class axis collapsed, make sure large
    # batches still expose >= 2 parallel batch tiles.
    if nct == 1 and nbt == 1 and B_pad >= 256:
        tb = _round_up(pl.cdiv(B_pad, 2), 16)
        B_pad = _round_up(B, tb)
        nbt = B_pad // tb

    # --- pad batch only when needed (no wrapper-side dtype cast of features).
    if B_pad != B:
        m1p = jnp.pad(m1_feature, ((0, B_pad - B), (0, 0)))
        m2p = jnp.pad(m2_feature, ((0, B_pad - B), (0, 0)))
    else:
        m1p, m2p = m1_feature, m2_feature

    # --- grid / BlockSpecs.
    if nct == 1:
        grid = (nbt,)
        dims = ("parallel",)
        feat1_spec = pl.BlockSpec((tb, F1), lambda i: (i, 0))
        feat2_spec = pl.BlockSpec((tb, F2), lambda i: (i, 0))
        wa_spec = pl.BlockSpec((1, F1, 2 * tc), lambda i: (0, 0, 0))
        wb_spec = pl.BlockSpec((1, F2, 2 * tc), lambda i: (0, 0, 0))
        bias_spec = pl.BlockSpec((1, tc), lambda i: (0, 0))
        out_spec = pl.BlockSpec((tb, tc), lambda i: (i, 0))
        feat_reads, w_reads = 1, 1
    else:
        # Pick grid order by HBM traffic: class-outer re-reads features nct
        # times; batch-outer re-reads weight slabs nbt times.
        class_outer_extra = (nct - 1) * B_pad * (F1 + F2) * feat_item
        batch_outer_extra = (nbt - 1) * (F1 + F2) * 2 * C_pad * w_item
        class_outer = class_outer_extra <= batch_outer_extra
        dims = ("parallel", "parallel")
        if class_outer:
            grid = (nct, nbt)
            feat_idx = lambda j, i: (i, 0)
            w_idx = lambda j, i: (j, 0, 0)
            bias_idx = lambda j, i: (0, j)
            out_idx = lambda j, i: (i, j)
            feat_reads, w_reads = nct, 1
        else:
            grid = (nbt, nct)
            feat_idx = lambda i, j: (i, 0)
            w_idx = lambda i, j: (j, 0, 0)
            bias_idx = lambda i, j: (0, j)
            out_idx = lambda i, j: (i, j)
            feat_reads, w_reads = 1, nbt
        feat1_spec = pl.BlockSpec((tb, F1), feat_idx)
        feat2_spec = pl.BlockSpec((tb, F2), feat_idx)
        wa_spec = pl.BlockSpec((1, F1, 2 * tc), w_idx)
        wb_spec = pl.BlockSpec((1, F2, 2 * tc), w_idx)
        bias_spec = pl.BlockSpec((1, tc), bias_idx)
        out_spec = pl.BlockSpec((tb, tc), out_idx)

    grid_spec = pltpu.PrefetchScalarGridSpec(
        num_scalar_prefetch=0,
        grid=grid,
        in_specs=[feat1_spec, feat2_spec, wa_spec, wb_spec,
                  bias_spec, bias_spec, bias_spec],
        out_specs=[out_spec, out_spec, out_spec],
    )

    out_shapes = tuple(jax.ShapeDtypeStruct((B_pad, C_pad), out_dtype)
                       for _ in range(3))

    flops = 4 * B_pad * C_pad * (F1 + F2)
    bytes_accessed = (feat_reads * B_pad * (F1 + F2) * feat_item
                      + w_reads * (F1 + F2) * 2 * C_pad * w_item
                      + 3 * B_pad * C_pad * out_item)
    cost = pl.CostEstimate(flops=int(flops), transcendentals=0,
                           bytes_accessed=int(bytes_accessed))

    kernel = functools.partial(_bert_resnet_kernel, tc=tc)

    text_p, image_p, mm_p = pl.pallas_call(
        kernel,
        out_shape=out_shapes,
        grid_spec=grid_spec,
        compiler_params=pltpu.CompilerParams(
            dimension_semantics=dims,
            vmem_limit_bytes=int(usable)),
        cost_estimate=cost,
    )(m1p, m2p, prepared["wa"], prepared["wb"],
      prepared["b1"], prepared["b2"], prepared["bmm"])

    # Strip batch / class padding.
    return (text_p[:B, :C], image_p[:B, :C], mm_p[:B, :C])


# ----------------------------------------------------------------------------
# Deterministic parameter init (mirrors nn.init.xavier_uniform_ + bias=0.01).
# Weights are stored transposed as (in_features, out_features).
# ----------------------------------------------------------------------------
def _xavier_uniform(key, fan_in, fan_out):
    bound = math.sqrt(6.0 / (fan_in + fan_out))
    return jax.random.uniform(key, (fan_in, fan_out), jnp.float32,
                              minval=-bound, maxval=bound)


def make_params(key, f1, f2, c):
    k1, k2, kmm = jax.random.split(key, 3)
    w1 = _xavier_uniform(k1, f1, c)
    w2 = _xavier_uniform(k2, f2, c)
    wmm = _xavier_uniform(kmm, f1 + f2, c)        # concat head: fan_in = f1 + f2
    return {
        "w1": w1, "b1": jnp.full((1, c), 0.01, jnp.float32),
        "w2": w2, "b2": jnp.full((1, c), 0.01, jnp.float32),
        "wmm1": wmm[:f1, :], "wmm2": wmm[f1:, :],
        "bmm": jnp.full((1, c), 0.01, jnp.float32),
    }


def reference_forward(m1, m2, p, compute_dtype=jnp.bfloat16):
    """Pure-JAX reference using the same bf16-in / f32-accum matmul dtype."""
    def matmul(x, w):
        return jnp.dot(x.astype(compute_dtype), w.astype(compute_dtype),
                       preferred_element_type=jnp.float32)
    text = matmul(m1, p["w1"]) + p["b1"]
    image = matmul(m2, p["w2"]) + p["b2"]
    # cat(m1, m2) @ Wmm  ==  m1 @ Wmm[:F1] + m2 @ Wmm[F1:]
    mm = matmul(m1, p["wmm1"]) + matmul(m2, p["wmm2"]) + p["bmm"]
    return text, image, mm


if __name__ == "__main__":
    # Small synthetic shapes standing in for (BERT 768, ResNet 2048, classes).
    B, F1, F2, C = 8, 32, 64, 16

    key = jax.random.PRNGKey(0)
    k_m1, k_m2, k_p = jax.random.split(key, 3)
    m1_feature = jax.random.normal(k_m1, (B, F1), jnp.float32)
    m2_feature = jax.random.normal(k_m2, (B, F2), jnp.float32)
    params = make_params(k_p, F1, F2, C)

    # One-time plan + weight fusion (model-load time, not per-call).
    plan = make_plan(F1, F2, C)
    prepared = jax.block_until_ready(prepare_params(params, plan))

    text_logits, image_logits, mm_logits = jax.block_until_ready(
        bert_resnet_forward(m1_feature, m2_feature, prepared, plan))

    ref_text, ref_image, ref_mm = reference_forward(m1_feature, m2_feature,
                                                    params)
    assert text_logits.shape == (B, C)
    assert image_logits.shape == (B, C)
    assert mm_logits.shape == (B, C)
    assert jnp.allclose(text_logits, ref_text, atol=1e-2, rtol=1e-2)
    assert jnp.allclose(image_logits, ref_image, atol=1e-2, rtol=1e-2)
    assert jnp.allclose(mm_logits, ref_mm, atol=1e-2, rtol=1e-2)

    print("KERNEL_OK")
</pallas_src>

<mosaic_0001>
module attributes {stable_mosaic.version = 11 : i64} {
  func.func @_bert_resnet_kernel(%arg0: i32, %arg1: memref<16x32xf32, #tpu.memory_space<vmem>>, %arg2: memref<16x64xf32, #tpu.memory_space<vmem>>, %arg3: memref<1x32x256xbf16, #tpu.memory_space<vmem>>, %arg4: memref<1x64x256xbf16, #tpu.memory_space<vmem>>, %arg5: memref<1x128xf32, #tpu.memory_space<vmem>>, %arg6: memref<1x128xf32, #tpu.memory_space<vmem>>, %arg7: memref<1x128xf32, #tpu.memory_space<vmem>>, %arg8: memref<16x128xf32, #tpu.memory_space<vmem>>, %arg9: memref<16x128xf32, #tpu.memory_space<vmem>>, %arg10: memref<16x128xf32, #tpu.memory_space<vmem>>) attributes {dimension_semantics = [#tpu.dimension_semantics<parallel>], iteration_bounds = array<i64: 1>, scalar_prefetch = 0 : i64, scratch_operands = 0 : i64, tpu.core_type = #tpu.core_type<tc>, window_params = [{transform_indices = @transform_0, window_bounds = array<i64: 16, 32>}, {transform_indices = @transform_1, window_bounds = array<i64: 16, 64>}, {pipeline_mode = #tpu.pipeline_mode<synchronous>, transform_indices = @transform_2, window_bounds = array<i64: 1, 32, 256>}, {pipeline_mode = #tpu.pipeline_mode<synchronous>, transform_indices = @transform_3, window_bounds = array<i64: 1, 64, 256>}, {pipeline_mode = #tpu.pipeline_mode<synchronous>, transform_indices = @transform_4, window_bounds = array<i64: 1, 128>}, {pipeline_mode = #tpu.pipeline_mode<synchronous>, transform_indices = @transform_5, window_bounds = array<i64: 1, 128>}, {pipeline_mode = #tpu.pipeline_mode<synchronous>, transform_indices = @transform_6, window_bounds = array<i64: 1, 128>}, {transform_indices = @transform_7, window_bounds = array<i64: 16, 128>}, {transform_indices = @transform_8, window_bounds = array<i64: 16, 128>}, {transform_indices = @transform_9, window_bounds = array<i64: 16, 128>}]} {
    %c0 = arith.constant 0 : index
    %c0_0 = arith.constant 0 : index
    %0 = vector.load %arg1[%c0, %c0_0] : memref<16x32xf32, #tpu.memory_space<vmem>>, vector<16x32xf32>
    %1 = arith.truncf %0 : vector<16x32xf32> to vector<16x32xbf16>
    %c0_1 = arith.constant 0 : index
    %c0_2 = arith.constant 0 : index
    %2 = vector.load %arg2[%c0_1, %c0_2] : memref<16x64xf32, #tpu.memory_space<vmem>>, vector<16x64xf32>
    %3 = arith.truncf %2 : vector<16x64xf32> to vector<16x64xbf16>
    %c0_3 = arith.constant 0 : index
    %c0_4 = arith.constant 0 : index
    %c0_5 = arith.constant 0 : index
    %4 = vector.load %arg3[%c0_3, %c0_4, %c0_5] : memref<1x32x256xbf16, #tpu.memory_space<vmem>>, vector<1x32x256xbf16>
    %5 = vector.shape_cast %4 : vector<1x32x256xbf16> to vector<32x256xbf16>
    %cst = arith.constant dense<0.000000e+00> : vector<16x256xf32>
    %6 = tpu.matmul %1, %5, %cst {dimension_numbers = #tpu.dot_dimension_numbers<[1], [0], [0], [1], [0, 0, 1, 1], [], []>} : vector<16x32xbf16>, vector<32x256xbf16>, vector<16x256xf32> -> vector<16x256xf32>
    %c0_6 = arith.constant 0 : index
    %c0_7 = arith.constant 0 : index
    %c0_8 = arith.constant 0 : index
    %7 = vector.load %arg4[%c0_6, %c0_7, %c0_8] : memref<1x64x256xbf16, #tpu.memory_space<vmem>>, vector<1x64x256xbf16>
    %8 = vector.shape_cast %7 : vector<1x64x256xbf16> to vector<64x256xbf16>
    %cst_9 = arith.constant dense<0.000000e+00> : vector<16x256xf32>
    %9 = tpu.matmul %3, %8, %cst_9 {dimension_numbers = #tpu.dot_dimension_numbers<[1], [0], [0], [1], [0, 0, 1, 1], [], []>} : vector<16x64xbf16>, vector<64x256xbf16>, vector<16x256xf32> -> vector<16x256xf32>
    %10 = vector.extract_strided_slice %6 {offsets = [0, 0], sizes = [16, 128], strides = [1, 1]} : vector<16x256xf32> to vector<16x128xf32>
    %c0_10 = arith.constant 0 : index
    %c0_11 = arith.constant 0 : index
    %11 = vector.load %arg5[%c0_10, %c0_11] : memref<1x128xf32, #tpu.memory_space<vmem>>, vector<1x128xf32>
    %12 = vector.broadcast %11 : vector<1x128xf32> to vector<16x128xf32>
    %13 = arith.addf %10, %12 : vector<16x128xf32>
    %c0_12 = arith.constant 0 : index
    %c0_13 = arith.constant 0 : index
    %14 = vector.load %arg8[%c0_12, %c0_13] : memref<16x128xf32, #tpu.memory_space<vmem>>, vector<16x128xf32>
    tpu.vector_store %arg8[%c0_12, %c0_13], %13 {strides = array<i32>} : memref<16x128xf32, #tpu.memory_space<vmem>>, vector<16x128xf32>,
    %15 = vector.extract_strided_slice %9 {offsets = [0, 0], sizes = [16, 128], strides = [1, 1]} : vector<16x256xf32> to vector<16x128xf32>
    %c0_14 = arith.constant 0 : index
    %c0_15 = arith.constant 0 : index
    %16 = vector.load %arg6[%c0_14, %c0_15] : memref<1x128xf32, #tpu.memory_space<vmem>>, vector<1x128xf32>
    %17 = vector.broadcast %16 : vector<1x128xf32> to vector<16x128xf32>
    %18 = arith.addf %15, %17 : vector<16x128xf32>
    %c0_16 = arith.constant 0 : index
    %c0_17 = arith.constant 0 : index
    %19 = vector.load %arg9[%c0_16, %c0_17] : memref<16x128xf32, #tpu.memory_space<vmem>>, vector<16x128xf32>
    tpu.vector_store %arg9[%c0_16, %c0_17], %18 {strides = array<i32>} : memref<16x128xf32, #tpu.memory_space<vmem>>, vector<16x128xf32>,
    %20 = vector.extract_strided_slice %6 {offsets = [0, 128], sizes = [16, 128], strides = [1, 1]} : vector<16x256xf32> to vector<16x128xf32>
    %21 = vector.extract_strided_slice %9 {offsets = [0, 128], sizes = [16, 128], strides = [1, 1]} : vector<16x256xf32> to vector<16x128xf32>
    %22 = arith.addf %20, %21 : vector<16x128xf32>
    %c0_18 = arith.constant 0 : index
    %c0_19 = arith.constant 0 : index
    %23 = vector.load %arg7[%c0_18, %c0_19] : memref<1x128xf32, #tpu.memory_space<vmem>>, vector<1x128xf32>
    %24 = vector.broadcast %23 : vector<1x128xf32> to vector<16x128xf32>
    %25 = arith.addf %22, %24 : vector<16x128xf32>
    %c0_20 = arith.constant 0 : index
    %c0_21 = arith.constant 0 : index
    %26 = vector.load %arg10[%c0_20, %c0_21] : memref<16x128xf32, #tpu.memory_space<vmem>>, vector<16x128xf32>
    tpu.vector_store %arg10[%c0_20, %c0_21], %25 {strides = array<i32>} : memref<16x128xf32, #tpu.memory_space<vmem>>, vector<16x128xf32>,
    return
  }
  func.func @transform_0(%arg0: i32) -> (i32, i32) {
    %c0_i32 = arith.constant 0 : i32
    %c0_i32_0 = arith.constant 0 : i32
    return %arg0, %c0_i32 : i32, i32
  }
  func.func @transform_1(%arg0: i32) -> (i32, i32) {
    %c0_i32 = arith.constant 0 : i32
    %c0_i32_0 = arith.constant 0 : i32
    return %arg0, %c0_i32 : i32, i32
  }
  func.func @transform_2(%arg0: i32) -> (i32, i32, i32) {
    %c0_i32 = arith.constant 0 : i32
    %c0_i32_0 = arith.constant 0 : i32
    %c0_i32_1 = arith.constant 0 : i32
    %c0_i32_2 = arith.constant 0 : i32
    return %c0_i32, %c0_i32_0, %c0_i32_1 : i32, i32, i32
  }
  func.func @transform_3(%arg0: i32) -> (i32, i32, i32) {
    %c0_i32 = arith.constant 0 : i32
    %c0_i32_0 = arith.constant 0 : i32
    %c0_i32_1 = arith.constant 0 : i32
    %c0_i32_2 = arith.constant 0 : i32
    return %c0_i32, %c0_i32_0, %c0_i32_1 : i32, i32, i32
  }
  func.func @transform_4(%arg0: i32) -> (i32, i32) {
    %c0_i32 = arith.constant 0 : i32
    %c0_i32_0 = arith.constant 0 : i32
    %c0_i32_1 = arith.constant 0 : i32
    return %c0_i32, %c0_i32_0 : i32, i32
  }
  func.func @transform_5(%arg0: i32) -> (i32, i32) {
    %c0_i32 = arith.constant 0 : i32
    %c0_i32_0 = arith.constant 0 : i32
    %c0_i32_1 = arith.constant 0 : i32
    return %c0_i32, %c0_i32_0 : i32, i32
  }
  func.func @transform_6(%arg0: i32) -> (i32, i32) {
    %c0_i32 = arith.constant 0 : i32
    %c0_i32_0 = arith.constant 0 : i32
    %c0_i32_1 = arith.constant 0 : i32
    return %c0_i32, %c0_i32_0 : i32, i32
  }
  func.func @transform_7(%arg0: i32) -> (i32, i32) {
    %c0_i32 = arith.constant 0 : i32
    %c0_i32_0 = arith.constant 0 : i32
    return %arg0, %c0_i32 : i32, i32
  }
  func.func @transform_8(%arg0: i32) -> (i32, i32) {
    %c0_i32 = arith.constant 0 : i32
    %c0_i32_0 = arith.constant 0 : i32
    return %arg0, %c0_i32 : i32, i32
  }
  func.func @transform_9(%arg0: i32) -> (i32, i32) {
    %c0_i32 = arith.constant 0 : i32
    %c0_i32_0 = arith.constant 0 : i32
    return %arg0, %c0_i32 : i32, i32
  }
}

</mosaic_0001>

<llo_original>
// kernel: tpu_custom_call.1
$region0: #{tpu_custom_call.1}
  #allocation0 [shape = 'u32[]', space=smem, size = 0x4, offset = 0x4, fixed_abs, tag = 'smem constant byte address 0x4 - core index']
  #allocation1 [shape = 'u32[144,128]{1,0:T(1,128)}', space=vmem, size = 0x12000, scoped, tag = 'internal scratch']
  %s0 = inlined_call_operand.hbm [shape: f32[16,32], index: 0, kind: input, shape index: {}]
  %s1 = inlined_call_operand.hbm [shape: f32[16,64], index: 1, kind: input, shape index: {}]
  %s2 = inlined_call_operand.hbm [shape: bf16[1,32,256], index: 2, kind: input, shape index: {}]
  %s3 = inlined_call_operand.hbm [shape: bf16[1,64,256], index: 3, kind: input, shape index: {}]
  %s4 = inlined_call_operand.vmem [shape: f32[1,128], index: 4, kind: input, shape index: {}]
  %s5 = inlined_call_operand.vmem [shape: f32[1,128], index: 5, kind: input, shape index: {}]
  %s6 = inlined_call_operand.vmem [shape: f32[1,128], index: 6, kind: input, shape index: {}]
  %s7 = inlined_call_operand.hbm [shape: f32[16,128], index: 7, kind: output, shape index: {0}]
  %s8 = inlined_call_operand.hbm [shape: f32[16,128], index: 8, kind: output, shape index: {1}]
  %s9 = inlined_call_operand.hbm [shape: f32[16,128], index: 9, kind: output, shape index: {2}]
  %10 = xla_tuple %s7, %s8, %s9
  %s11 = sld [smem:[#allocation0]]
  $region70: #{tpu_custom_call.1} parent=0
    _
  %s13 = ssub.s32 1, %s11
  %s14 = scalar_select 0, %s13, %s11
  $region1: #{tpu_custom_call.1} parent=0
    #allocation2 [shape = 'u8[8192]{0}', space=vmem, size = 0x2000, scoped, tag = 'input window, operand 0, single buffered']
    #allocation3 [shape = 's32[1]{0}', space=sflag, size = 0x4, scoped, tag = 'scoped memory for tpu_custom_call.1']
    #allocation4 [shape = 's32[1]{0}', space=sflag, size = 0x4, scoped, tag = 'scoped memory for tpu_custom_call.1']
    #allocation5 [shape = 'u8[8192]{0}', space=vmem, size = 0x2000, scoped, tag = 'input window, operand 1, single buffered']
    #allocation6 [shape = 's32[1]{0}', space=sflag, size = 0x4, scoped, tag = 'scoped memory for tpu_custom_call.1']
    #allocation7 [shape = 'u8[16384]{0}', space=vmem, size = 0x4000, scoped, tag = 'input window, operand 2, single buffered']
    #allocation8 [shape = 'u8[32768]{0}', space=vmem, size = 0x8000, scoped, tag = 'input window, operand 3, single buffered']
    #allocation9 [shape = 's32[1]{0}', space=sflag, size = 0x4, scoped, tag = 'scoped memory for tpu_custom_call.1']
    #allocation10 [shape = 'u8[8192]{0}', space=vmem, size = 0x2000, scoped, tag = 'output window, operand 0, single buffered']
    #allocation11 [shape = 'u8[8192]{0}', space=vmem, size = 0x2000, scoped, tag = 'output window, operand 1, single buffered']
    #allocation12 [shape = 's32[1]{0}', space=sflag, size = 0x4, scoped, tag = 'scoped memory for tpu_custom_call.1']
    #allocation13 [shape = 'u8[8192]{0}', space=vmem, size = 0x2000, scoped, tag = 'output window, operand 2, single buffered']
    %15 = vsyncpa [#allocation3], 0
    %16 = vsyncpa [#allocation6], 0
    %17 = vsyncpa [#allocation9], 0
    %18 = vsyncpa [#allocation4], 0
    %19 = vsyncpa [#allocation12], 0
    // Predicated region
    $region2: #{tpu_custom_call.1} parent=1 // pred_check
      _
    $region3: #{tpu_custom_call.1} parent=1 // pred_check_branch
      %21 = sbr.rel (0) target = $region5
    $region4: #{tpu_custom_call.1} parent=1 // pred_region
      %s23 = ssub.s32 256, 256
      %24 = vsyncadd [#allocation3], %s23
      %s25 = sshll.u32 [#allocation2], 4
      %s26 = int_to_ptr.vmem [resolvable:$true] %s25
      %31 = dma.hbm_to_vmem [thread:$0]  %s0, 256, %s26, [#allocation3], 128, 128, 8
    $region5: #{tpu_custom_call.1} parent=1 // pred_fallthru
      _
    // Predicated region
    $region6: #{tpu_custom_call.1} parent=1 // pred_check
      _
    $region7: #{tpu_custom_call.1} parent=1 // pred_check_branch
      %33 = sbr.rel (0) target = $region9
    $region8: #{tpu_custom_call.1} parent=1 // pred_region
      %s35 = ssub.s32 256, 256
      %36 = vsyncadd [#allocation6], %s35
      %s37 = sshll.u32 [#allocation5], 4
      %s38 = int_to_ptr.vmem [resolvable:$true] %s37
      %43 = dma.hbm_to_vmem [thread:$0]  %s1, 256, %s38, [#allocation6], 128, 128, 8
    $region9: #{tpu_custom_call.1} parent=1 // pred_fallthru
      _
    // Predicated region
    $region10: #{tpu_custom_call.1} parent=1 // pred_check
      _
    $region11: #{tpu_custom_call.1} parent=1 // pred_check_branch
      %45 = sbr.rel (0) target = $region13
    $region12: #{tpu_custom_call.1} parent=1 // pred_region
      %s47 = ssub.s32 512, 512
      %48 = vsyncadd [#allocation6], %s47
      %s49 = sshll.u32 [#allocation7], 4
      %s50 = int_to_ptr.vmem [resolvable:$true] %s49
      %55 = dma.hbm_to_vmem [thread:$0]  %s2, 512, %s50, [#allocation6], 128, 128, 8
    $region13: #{tpu_custom_call.1} parent=1 // pred_fallthru
      _
    // Predicated region
    $region14: #{tpu_custom_call.1} parent=1 // pred_check
      _
    $region15: #{tpu_custom_call.1} parent=1 // pred_check_branch
      %57 = sbr.rel (0) target = $region17
    $region16: #{tpu_custom_call.1} parent=1 // pred_region
      %s59 = ssub.s32 1024, 1024
      %60 = vsyncadd [#allocation9], %s59
      %s61 = sshll.u32 [#allocation8], 4
      %s62 = int_to_ptr.vmem [resolvable:$true] %s61
      %67 = dma.hbm_to_vmem [thread:$0]  %s3, 1024, %s62, [#allocation9], 128, 128, 8
    $region17: #{tpu_custom_call.1} parent=1 // pred_fallthru
      _
    // Predicated region
    $region18: #{tpu_custom_call.1} parent=1 // pred_check
      _
    $region19: #{tpu_custom_call.1} parent=1 // pred_check_branch
      %69 = sbr.rel (0) target = $region21
    $region20: #{tpu_custom_call.1} parent=1 // pred_region
      _
    $region21: #{tpu_custom_call.1} parent=1 // pred_fallthru
      _
    // Predicated region
    $region22: #{tpu_custom_call.1} parent=1 // pred_check
      _
    $region23: #{tpu_custom_call.1} parent=1 // pred_check_branch
      %71 = sbr.rel (0) target = $region25
    $region24: #{tpu_custom_call.1} parent=1 // pred_region
      _
    $region25: #{tpu_custom_call.1} parent=1 // pred_fallthru
      _
    // Predicated region
    $region26: #{tpu_custom_call.1} parent=1 // pred_check
      _
    $region27: #{tpu_custom_call.1} parent=1 // pred_check_branch
      %73 = sbr.rel (0) target = $region29
    $region28: #{tpu_custom_call.1} parent=1 // pred_region
      _
    $region29: #{tpu_custom_call.1} parent=1 // pred_fallthru
      _
    // Predicated region
    $region30: #{tpu_custom_call.1} parent=1 // pred_check
      _
    $region31: #{tpu_custom_call.1} parent=1 // pred_check_branch
      %75 = sbr.rel (0) target = $region33
    $region32: #{tpu_custom_call.1} parent=1 // pred_region
      %76 = dma.done [#allocation3], 256
    $region33: #{tpu_custom_call.1} parent=1 // pred_fallthru
      _
    // Predicated region
    $region34: #{tpu_custom_call.1} parent=1 // pred_check
      _
    $region35: #{tpu_custom_call.1} parent=1 // pred_check_branch
      %78 = sbr.rel (0) target = $region37
    $region36: #{tpu_custom_call.1} parent=1 // pred_region
      %79 = dma.done [#allocation6], 256
    $region37: #{tpu_custom_call.1} parent=1 // pred_fallthru
      _
    // Predicated region
    $region38: #{tpu_custom_call.1} parent=1 // pred_check
      _
    $region39: #{tpu_custom_call.1} parent=1 // pred_check_branch
      %81 = sbr.rel (0) target = $region41
    $region40: #{tpu_custom_call.1} parent=1 // pred_region
      %82 = dma.done [#allocation6], 512
    $region41: #{tpu_custom_call.1} parent=1 // pred_fallthru
      _
    // Predicated region
    $region42: #{tpu_custom_call.1} parent=1 // pred_check
      _
    $region43: #{tpu_custom_call.1} parent=1 // pred_check_branch
      %84 = sbr.rel (0) target = $region45
    $region44: #{tpu_custom_call.1} parent=1 // pred_region
      %85 = dma.done [#allocation9], 1024
    $region45: #{tpu_custom_call.1} parent=1 // pred_fallthru
      _
    %v87 = vld [vmem:[#allocation2] sm:$0xff]
    %v88 = vld [vmem:[#allocation2 + $0x8] sm:$0xff]
    %v89 = vpack.c.bf16 %v88, %v87
    %v90 = vld [vmem:[#allocation5] sm:$0xff]
    %v91 = vld [vmem:[#allocation5 + $0x8] sm:$0xff]
    %v92 = vpack.c.bf16 %v91, %v90
    %v93 = vld [vmem:[#allocation7] sm:$0xff]
    %v94 = vld [vmem:[#allocation7 + $0x8] sm:$0xff]
    %v95 = vld [vmem:[#allocation7 + $0x10] sm:$0xff]
    %v96 = vld [vmem:[#allocation7 + $0x18] sm:$0xff]
    %v101 = vunpack.c.l.b16 %v93
    %v102 = vunpack.c.h.b16 %v93
    %v103 = vunpack.c.l.b16 %v94
    %v104 = vunpack.c.h.b16 %v94
    %v105 = vunpack.c.l.b16 %v95
    %v106 = vunpack.c.h.b16 %v95
    %v107 = vunpack.c.l.b16 %v96
    %v108 = vunpack.c.h.b16 %v96
    %v109 = vpack.c.b16 %v103, %v101
    %v110 = vpack.c.b16 %v104, %v102
    %v111 = vpack.c.b16 %v107, %v105
    %v112 = vpack.c.b16 %v108, %v106
    %vm117 = vcmask 261120
    %v119 = vsel %vm117, %v89, 0
    %121 = vmatprep.subr.bf16.mxu0 %v110
    %122 = vmatpush1.bf16.msra.mxu0 %v109
    %123 = vmatprep.subr.bf16.mxu0 %v112
    %124 = vmatpush1.bf16.msra.mxu0 %v111
    %125 = vmatprep.subr.bf16.mxu0 0
    %126 = vmatpush1.bf16.msra.mxu0 0
    %127 = vmatprep.subr.bf16.mxu0 0
    %128 = vmatpush1.bf16.msra.mxu0 0
    %129 = vmatprep.subr.bf16.mxu0 0
    %130 = vmatpush1.bf16.msra.mxu0 0
    %131 = vmatprep.subr.bf16.mxu0 0
    %132 = vmatpush1.bf16.msra.mxu0 0
    %133 = vmatprep.subr.bf16.mxu0 0
    %134 = vmatpush1.bf16.msra.mxu0 0
    %135 = vmatprep.subr.bf16.mxu0 0
    %136 = vmatpush1.bf16.msra.mxu0 0
    %137 = vmatprep.subr.bf16.mxu0 0
    %138 = vmatpush1.bf16.msra.mxu0 0
    %139 = vmatprep.subr.bf16.mxu0 0
    %140 = vmatpush1.bf16.msra.mxu0 0
    %141 = vmatprep.subr.bf16.mxu0 0
    %142 = vmatpush1.bf16.msra.mxu0 0
    %143 = vmatprep.subr.bf16.mxu0 0
    %144 = vmatpush1.bf16.msra.mxu0 0
    %145 = vmatprep.subr.bf16.mxu0 0
    %146 = vmatpush1.bf16.msra.mxu0 0
    %147 = vmatprep.subr.bf16.mxu0 0
    %148 = vmatpush1.bf16.msra.mxu0 0
    %149 = vmatprep.subr.bf16.mxu0 0
    %150 = vmatpush1.bf16.msra.mxu0 0
    %151 = vmatprep.subr.bf16.mxu0 0
    %152 = vmatpush1.bf16.msra.mxu0 0
    %153 = vmatprep.mubr.bf16.mxu0 0
    %154 = vmatmul.mubr.bf16.gmra.mrb[0].mxu0 %v119
    %v155 = vpop.f32.mrb[0].mxu0
    %v156 = vadd.f32 0.0, %v155
    %v157 = vpop.f32.mrb[0].mxu0
    %v158 = vadd.f32 0.0, %v157
    %v159 = vpop.f32.mrb[0].mxu0
    %v160 = vadd.f32 0.0, %v159
    %v161 = vpop.f32.mrb[0].mxu0
    %v162 = vadd.f32 0.0, %v161
    %163 = vdwg.mxu0
    %v164 = vld [vmem:[#allocation8] sm:$0xff]
    %v165 = vld [vmem:[#allocation8 + $0x8] sm:$0xff]
    %v166 = vld [vmem:[#allocation8 + $0x10] sm:$0xff]
    %v167 = vld [vmem:[#allocation8 + $0x18] sm:$0xff]
    %v168 = vld [vmem:[#allocation8 + $0x20] sm:$0xff]
    %v169 = vld [vmem:[#allocation8 + $0x28] sm:$0xff]
    %v170 = vld [vmem:[#allocation8 + $0x30] sm:$0xff]
    %v171 = vld [vmem:[#allocation8 + $0x38] sm:$0xff]
    %v180 = vunpack.c.l.b16 %v164
    %v181 = vunpack.c.h.b16 %v164
    %v182 = vunpack.c.l.b16 %v165
    %v183 = vunpack.c.h.b16 %v165
    %v184 = vunpack.c.l.b16 %v166
    %v185 = vunpack.c.h.b16 %v166
    %v186 = vunpack.c.l.b16 %v167
    %v187 = vunpack.c.h.b16 %v167
    %v188 = vunpack.c.l.b16 %v168
    %v189 = vunpack.c.h.b16 %v168
    %v190 = vunpack.c.l.b16 %v169
    %v191 = vunpack.c.h.b16 %v169
    %v192 = vunpack.c.l.b16 %v170
    %v193 = vunpack.c.h.b16 %v170
    %v194 = vunpack.c.l.b16 %v171
    %v195 = vunpack.c.h.b16 %v171
    %v196 = vpack.c.b16 %v182, %v180
    %v197 = vpack.c.b16 %v183, %v181
    %v198 = vpack.c.b16 %v186, %v184
    %v199 = vpack.c.b16 %v187, %v185
    %v200 = vpack.c.b16 %v190, %v188
    %v201 = vpack.c.b16 %v191, %v189
    %v202 = vpack.c.b16 %v194, %v192
    %v203 = vpack.c.b16 %v195, %v193
    %vm212 = vcmask 523264
    %v214 = vsel %vm212, %v92, 0
    %216 = vmatprep.subr.bf16.mxu0 %v197
    %217 = vmatpush1.bf16.msra.mxu0 %v196
    %218 = vmatprep.subr.bf16.mxu0 %v199
    %219 = vmatpush1.bf16.msra.mxu0 %v198
    %220 = vmatprep.subr.bf16.mxu0 %v201
    %221 = vmatpush1.bf16.msra.mxu0 %v200
    %222 = vmatprep.subr.bf16.mxu0 %v203
    %223 = vmatpush1.bf16.msra.mxu0 %v202
    %224 = vmatprep.subr.bf16.mxu0 0
    %225 = vmatpush1.bf16.msra.mxu0 0
    %226 = vmatprep.subr.bf16.mxu0 0
    %227 = vmatpush1.bf16.msra.mxu0 0
    %228 = vmatprep.subr.bf16.mxu0 0
    %229 = vmatpush1.bf16.msra.mxu0 0
    %230 = vmatprep.subr.bf16.mxu0 0
    %231 = vmatpush1.bf16.msra.mxu0 0
    %232 = vmatprep.subr.bf16.mxu0 0
    %233 = vmatpush1.bf16.msra.mxu0 0
    %234 = vmatprep.subr.bf16.mxu0 0
    %235 = vmatpush1.bf16.msra.mxu0 0
    %236 = vmatprep.subr.bf16.mxu0 0
    %237 = vmatpush1.bf16.msra.mxu0 0
    %238 = vmatprep.subr.bf16.mxu0 0
    %239 = vmatpush1.bf16.msra.mxu0 0
    %240 = vmatprep.subr.bf16.mxu0 0
    %241 = vmatpush1.bf16.msra.mxu0 0
    %242 = vmatprep.subr.bf16.mxu0 0
    %243 = vmatpush1.bf16.msra.mxu0 0
    %244 = vmatprep.subr.bf16.mxu0 0
    %245 = vmatpush1.bf16.msra.mxu0 0
    %246 = vmatprep.subr.bf16.mxu0 0
    %247 = vmatpush1.bf16.msra.mxu0 0
    %248 = vmatprep.mubr.bf16.mxu0 0
    %249 = vmatmul.mubr.bf16.gmra.mrb[0].mxu0 %v214
    %v250 = vpop.f32.mrb[0].mxu0
    %v251 = vadd.f32 0.0, %v250
    %v252 = vpop.f32.mrb[0].mxu0
    %v253 = vadd.f32 0.0, %v252
    %v254 = vpop.f32.mrb[0].mxu0
    %v255 = vadd.f32 0.0, %v254
    %v256 = vpop.f32.mrb[0].mxu0
    %v257 = vadd.f32 0.0, %v256
    %258 = vdwg.mxu0
    %v259 = vld [vmem:[%s4] sm:$0x1]
    %v261 = vlaneseq
    %v262 = vshrl.u32 %v261, 7
    %v263 = vsub.s32 0, %v262
    %v264 = vrot.slane %v259, %v263
    %v266 = vadd.f32 %v156, %v264
    %v267 = vadd.f32 %v160, %v264
    %268 = vst [vmem:[#allocation10] sm:$0xff] %v266
    %269 = vst [vmem:[#allocation10 + $0x8] sm:$0xff] %v267
    %v270 = vld [vmem:[%s5] sm:$0x1]
    %v272 = vlaneseq
    %v273 = vshrl.u32 %v272, 7
    %v274 = vsub.s32 0, %v273
    %v275 = vrot.slane %v270, %v274
    %v277 = vadd.f32 %v251, %v275
    %v278 = vadd.f32 %v255, %v275
    %279 = vst [vmem:[#allocation11] sm:$0xff] %v277
    %280 = vst [vmem:[#allocation11 + $0x8] sm:$0xff] %v278
    %v281 = vadd.f32 %v158, %v253
    %v282 = vadd.f32 %v162, %v257
    %v283 = vld [vmem:[%s6] sm:$0x1]
    %v285 = vlaneseq
    %v286 = vshrl.u32 %v285, 7
    %v287 = vsub.s32 0, %v286
    %v288 = vrot.slane %v283, %v287
    %v290 = vadd.f32 %v281, %v288
    %v291 = vadd.f32 %v282, %v288
    %292 = vst [vmem:[#allocation13] sm:$0xff] %v290
    %293 = vst [vmem:[#allocation13 + $0x8] sm:$0xff] %v291
    // Predicated region
    $region46: #{tpu_custom_call.1} parent=1 // pred_check
      _
    $region47: #{tpu_custom_call.1} parent=1 // pred_check_branch
      %295 = sbr.rel (0) target = $region49
    $region48: #{tpu_custom_call.1} parent=1 // pred_region
      %s297 = ssub.s32 256, 256
      %298 = vsyncadd [#allocation4], %s297
      %s299 = sshll.u32 [#allocation10], 4
      %s300 = int_to_ptr.vmem [resolvable:$true] %s299
      %305 = dma.vmem_to_hbm [thread:$0]  %s300, 256, %s7, [#allocation4], 128, 128, 8
    $region49: #{tpu_custom_call.1} parent=1 // pred_fallthru
      _
    // Predicated region
    $region50: #{tpu_custom_call.1} parent=1 // pred_check
      _
    $region51: #{tpu_custom_call.1} parent=1 // pred_check_branch
      %307 = sbr.rel (0) target = $region53
    $region52: #{tpu_custom_call.1} parent=1 // pred_region
      %s309 = ssub.s32 256, 256
      %310 = vsyncadd [#allocation12], %s309
      %s311 = sshll.u32 [#allocation11], 4
      %s312 = int_to_ptr.vmem [resolvable:$true] %s311
      %317 = dma.vmem_to_hbm [thread:$0]  %s312, 256, %s8, [#allocation12], 128, 128, 8
    $region53: #{tpu_custom_call.1} parent=1 // pred_fallthru
      _
    // Predicated region
    $region54: #{tpu_custom_call.1} parent=1 // pred_check
      _
    $region55: #{tpu_custom_call.1} parent=1 // pred_check_branch
      %319 = sbr.rel (0) target = $region57
    $region56: #{tpu_custom_call.1} parent=1 // pred_region
      %s321 = ssub.s32 256, 256
      %322 = vsyncadd [#allocation12], %s321
      %s323 = sshll.u32 [#allocation13], 4
      %s324 = int_to_ptr.vmem [resolvable:$true] %s323
      %329 = dma.vmem_to_hbm [thread:$0]  %s324, 256, %s9, [#allocation12], 128, 128, 8
    $region57: #{tpu_custom_call.1} parent=1 // pred_fallthru
      _
    // Predicated region
    $region58: #{tpu_custom_call.1} parent=1 // pred_check
      _
    $region59: #{tpu_custom_call.1} parent=1 // pred_check_branch
      %331 = sbr.rel (0) target = $region61
    $region60: #{tpu_custom_call.1} parent=1 // pred_region
      %332 = dma.done [#allocation4], 256
    $region61: #{tpu_custom_call.1} parent=1 // pred_fallthru
      _
    // Predicated region
    $region62: #{tpu_custom_call.1} parent=1 // pred_check
      _
    $region63: #{tpu_custom_call.1} parent=1 // pred_check_branch
      %334 = sbr.rel (0) target = $region65
    $region64: #{tpu_custom_call.1} parent=1 // pred_region
      %335 = dma.done [#allocation12], 256
    $region65: #{tpu_custom_call.1} parent=1 // pred_fallthru
      _
    // Predicated region
    $region66: #{tpu_custom_call.1} parent=1 // pred_check
      _
    $region67: #{tpu_custom_call.1} parent=1 // pred_check_branch
      %337 = sbr.rel (0) target = $region69
    $region68: #{tpu_custom_call.1} parent=1 // pred_region
      %338 = dma.done [#allocation12], 256
    $region69: #{tpu_custom_call.1} parent=1 // pred_fallthru
      _
    %339 = vsyncpa [#allocation3], 1
    %340 = vsyncpa [#allocation6], 1
    %341 = vsyncpa [#allocation9], 1
    %342 = vsyncpa [#allocation4], 1
    %343 = vsyncpa [#allocation12], 1

</llo_original>
